<compile_context>
chip_gen: v7x
topology: tpu7x:2x2x1
jax: 0.10.0
libtpu: 0.0.40
codegen_flags: <defaults>
</compile_context>

<pallas_src>
from functools import partial
import math

import jax
import jax.numpy as jnp
from jax import lax
from jax.experimental import pallas as pl
from jax.experimental.pallas import tpu as pltpu

_PAD_ID = -1  # class id of zero-padded rows/cols; never equals any real id


def _nt_xent_sup_kernel(zr_ref, zc_ref, cr_ref, cc_ref,
                        per_row_ref, valid_ref,
                        denom_acc, numer_acc, cnt_acc,
                        *, inv_t, mask_pad_cols):
    ri = pl.program_id(0)                 # row-tile index  ("parallel")
    ci = pl.program_id(1)                 # col-tile index  ("arbitrary", reduction)
    tr = zr_ref.shape[0]
    tc = zc_ref.shape[0]

    @pl.when(ci == 0)
    def _init():
        denom_acc[...] = jnp.zeros_like(denom_acc)
        numer_acc[...] = jnp.zeros_like(numer_acc)
        cnt_acc[...] = jnp.zeros_like(cnt_acc)

    # sim / T for this (tr, tc) tile: bf16 operands on the MXU, f32 accumulate.
    # zc is pre-scaled by 1/T in the wrapper; contracting dim 1 of both
    # operands gives A @ B^T directly (no in-kernel transpose op).
    s = lax.dot_general(zr_ref[...], zc_ref[...],
                        dimension_numbers=(((1,), (1,)), ((), ())),
                        preferred_element_type=jnp.float32)

    # exp(sim/T - 1/T): shifted so the max possible value (cos == 1) maps to
    # exp(0); the shift is added back inside the log at finalize.
    e = jnp.exp(s - inv_t)

    cc = cc_ref[...]                                        # (1, tc) int32
    pos_b = cr_ref[...] == cc                               # (tr, tc) bool

    if mask_pad_cols:
        # Zero-padded columns must not contribute to the denominator.  (They
        # can never match a real row's class id, so numer / cnt are already
        # unaffected.)
        e = jnp.where(cc != _PAD_ID, e, 0.0)

    denom_acc[...] += jnp.sum(e, axis=-1, keepdims=True)
    numer_acc[...] += jnp.sum(jnp.where(pos_b, s, 0.0), axis=-1, keepdims=True)
    cnt_acc[...] += jnp.sum(pos_b.astype(jnp.float32), axis=-1, keepdims=True)

    # Exact diagonal correction — only on tiles that intersect the diagonal.
    row0 = ri * tr
    col0 = ci * tc

    @pl.when(jnp.logical_and(row0 < col0 + tc, col0 < row0 + tr))
    def _diag():
        gr = row0 + lax.broadcasted_iota(jnp.int32, (tr, tc), 0)
        gc = col0 + lax.broadcasted_iota(jnp.int32, (tr, tc), 1)
        eye_b = gr == gc
        denom_acc[...] = denom_acc[...] - jnp.sum(
            jnp.where(eye_b, e, 0.0), axis=-1, keepdims=True)
        numer_acc[...] = numer_acc[...] - jnp.sum(
            jnp.where(eye_b, s, 0.0), axis=-1, keepdims=True)
        cnt_acc[...] = cnt_acc[...] - jnp.sum(
            eye_b.astype(jnp.float32), axis=-1, keepdims=True)

    @pl.when(ci == pl.num_programs(1) - 1)
    def _finalize():
        cnt = cnt_acc[...]
        valid = cnt > 0.0
        safe_cnt = jnp.where(valid, cnt, 1.0)
        per_row = jnp.where(
            valid,
            (jnp.log(denom_acc[...]) + inv_t) - numer_acc[...] / safe_cnt,
            0.0)
        per_row_ref[...] = per_row
        valid_ref[...] = valid.astype(jnp.float32)


def nt_xent_sup(z_i, z_j, label, temperature=0.1, *, row_tile=256, col_tile=512):
    """Pallas implementation of NT_Xent_Sup.forward. Returns a scalar loss."""
    n = 2 * z_i.shape[0]
    d = z_i.shape[1]
    inv_t = float(1.0 / temperature)

    # --- prep: one cheap fused XLA pass over (N, D) ---
    z = jnp.concatenate([z_i, z_j], axis=0).astype(jnp.float32)
    norm = jnp.sqrt(jnp.sum(z * z, axis=-1, keepdims=True))
    zn = z / jnp.maximum(norm, 1e-12)            # F.normalize(p=2, dim=-1)

    # One-hot label matrix -> int32 class ids (exact for one-hot labels, which
    # is what the torch module's dot-product mask semantics imply).
    # TODO(synk): multi-hot label rows are approximated by argmax; the torch
    # reference would weight positives by the label dot product instead.
    lab = label.astype(jnp.float32)
    has_label = jnp.sum(lab, axis=-1) > 0
    cls = jnp.where(has_label,
                    jnp.argmax(lab, axis=-1).astype(jnp.int32),
                    -(jnp.arange(n, dtype=jnp.int32) + 2))   # unique ids <= -2

    # --- tiling: fixed tiles when divisible, one full-extent tile for small N,
    # zero-pad to a common tile multiple otherwise. ---
    if n % row_tile == 0 and n % col_tile == 0:
        tr, tc, n_pad = row_tile, col_tile, n
    elif n <= max(row_tile, col_tile):
        tr, tc, n_pad = n, n, n                  # single full-extent tile
    else:
        m = math.lcm(row_tile, col_tile)
        n_pad = ((n + m - 1) // m) * m
        tr, tc = row_tile, col_tile
    pad = n_pad - n

    if pad:
        zn = jnp.pad(zn, ((0, pad), (0, 0)))
        cls = jnp.concatenate([cls, jnp.full((pad,), _PAD_ID, dtype=jnp.int32)])

    zr = zn.astype(jnp.bfloat16)                 # row operand
    zc = (zn * inv_t).astype(jnp.bfloat16)       # col operand, 1/T folded in
    cls_row = cls.reshape(n_pad, 1)
    cls_col = cls.reshape(1, n_pad)

    kernel = partial(_nt_xent_sup_kernel, inv_t=inv_t, mask_pad_cols=pad > 0)
    per_row, valid = pl.pallas_call(
        kernel,
        out_shape=(jax.ShapeDtypeStruct((n_pad, 1), jnp.float32),
                   jax.ShapeDtypeStruct((n_pad, 1), jnp.float32)),
        grid=(n_pad // tr, n_pad // tc),
        in_specs=[
            pl.BlockSpec((tr, d), lambda ri, ci: (ri, 0)),   # zn rows (bf16)
            pl.BlockSpec((tc, d), lambda ri, ci: (ci, 0)),   # zn/T cols (bf16)
            pl.BlockSpec((tr, 1), lambda ri, ci: (ri, 0)),   # class ids, rows
            pl.BlockSpec((1, tc), lambda ri, ci: (0, ci)),   # class ids, cols
        ],
        out_specs=(
            pl.BlockSpec((tr, 1), lambda ri, ci: (ri, 0)),
            pl.BlockSpec((tr, 1), lambda ri, ci: (ri, 0)),
        ),
        scratch_shapes=[
            pltpu.VMEM((tr, 1), jnp.float32),    # denominator (sum exp)
            pltpu.VMEM((tr, 1), jnp.float32),    # numerator   (sum sim * pos)
            pltpu.VMEM((tr, 1), jnp.float32),    # positive count
        ],
        compiler_params=pltpu.CompilerParams(
            dimension_semantics=("parallel", "arbitrary")),
    )(zr, zc, cls_row, cls_col)

    per_row = per_row[:n, 0]
    valid = valid[:n, 0]
    # Tiny final reduction (O(N)) done by XLA.  If no row has a positive pair
    # this is 0/0 -> NaN, matching the torch reference (mean over empty set).
    return jnp.sum(per_row) / jnp.sum(valid)


def _reference(z_i, z_j, label, temperature=0.1, match_kernel_dtypes=False):
    """Pure-JAX reference mirroring the PyTorch forward."""
    z = jnp.concatenate([z_i, z_j], axis=0).astype(jnp.float32)
    zn = z / jnp.maximum(jnp.linalg.norm(z, axis=-1, keepdims=True), 1e-12)
    if match_kernel_dtypes:
        a = zn.astype(jnp.bfloat16)
        b = (zn * (1.0 / temperature)).astype(jnp.bfloat16)
        sim = jnp.dot(a, b.T, preferred_element_type=jnp.float32)
    else:
        sim = (zn @ zn.T) / temperature
    lab = label.astype(jnp.float32)
    n = z.shape[0]
    eye = jnp.eye(n, dtype=jnp.float32)
    mask_pos = (lab @ lab.T) * (1.0 - eye)
    mask_neg = 1.0 - eye
    pos_cnt = jnp.sum(mask_pos, axis=-1)
    denom = jnp.sum(jnp.exp(sim) * mask_neg, axis=-1)
    numer = jnp.sum(sim * mask_pos, axis=-1)
    valid = pos_cnt > 0
    per = jnp.where(valid, jnp.log(denom) - numer / jnp.where(valid, pos_cnt, 1.0), 0.0)
    return jnp.sum(per) / jnp.sum(valid.astype(jnp.float32))


if __name__ == "__main__":
    key = jax.random.PRNGKey(0)
    k1, k2, k3, k4 = jax.random.split(key, 4)

    # --- Test 1: tiny shapes -> single full-extent tile path ---
    B, D, C = 4, 32, 4          # N = 2B = 8 samples, 32-d features, 4 classes
    z_i = jax.random.normal(k1, (B, D), dtype=jnp.float32)
    z_j = jax.random.normal(k2, (B, D), dtype=jnp.float32)
    classes = jnp.array([0, 1, 2, 3, 0, 1, 2, 3], dtype=jnp.int32)
    label = jax.nn.one_hot(classes, C, dtype=jnp.float32)        # (2B, C)

    loss = jax.block_until_ready(nt_xent_sup(z_i, z_j, label, temperature=0.1))
    ref_match = jax.block_until_ready(_reference(z_i, z_j, label, 0.1, True))
    ref_exact = jax.block_until_ready(_reference(z_i, z_j, label, 0.1, False))
    assert bool(jnp.isfinite(loss)), loss
    assert jnp.allclose(loss, ref_match, rtol=1e-4, atol=1e-4), (loss, ref_match)
    assert jnp.allclose(loss, ref_exact, rtol=1e-1, atol=1e-1), (loss, ref_exact)

    # --- Test 2: N not a tile multiple -> exercises zero-padding + col mask ---
    B2, C2 = 72, 8              # N = 144, padded to 256 with (8, 128) tiles
    z_i2 = jax.random.normal(k3, (B2, D), dtype=jnp.float32)
    z_j2 = jax.random.normal(k4, (B2, D), dtype=jnp.float32)
    classes2 = jnp.arange(2 * B2, dtype=jnp.int32) % C2
    label2 = jax.nn.one_hot(classes2, C2, dtype=jnp.float32)

    loss2 = jax.block_until_ready(
        nt_xent_sup(z_i2, z_j2, label2, temperature=0.1, row_tile=8, col_tile=128))
    ref2_match = jax.block_until_ready(_reference(z_i2, z_j2, label2, 0.1, True))
    ref2_exact = jax.block_until_ready(_reference(z_i2, z_j2, label2, 0.1, False))
    assert bool(jnp.isfinite(loss2)), loss2
    assert jnp.allclose(loss2, ref2_match, rtol=1e-4, atol=1e-4), (loss2, ref2_match)
    assert jnp.allclose(loss2, ref2_exact, rtol=1e-1, atol=1e-1), (loss2, ref2_exact)

    print("KERNEL_OK")
</pallas_src>

<mosaic_0001>
module attributes {stable_mosaic.version = 11 : i64} {
  func.func @_nt_xent_sup_kernel(%arg0: i32, %arg1: i32, %arg2: memref<8x32xbf16, #tpu.memory_space<vmem>>, %arg3: memref<8x32xbf16, #tpu.memory_space<vmem>>, %arg4: memref<8x1xi32, #tpu.memory_space<vmem>>, %arg5: memref<1x8xi32, #tpu.memory_space<vmem>>, %arg6: memref<8x1xf32, #tpu.memory_space<vmem>>, %arg7: memref<8x1xf32, #tpu.memory_space<vmem>>, %arg8: memref<8x1xf32, #tpu.memory_space<vmem>>, %arg9: memref<8x1xf32, #tpu.memory_space<vmem>>, %arg10: memref<8x1xf32, #tpu.memory_space<vmem>>) attributes {dimension_semantics = [#tpu.dimension_semantics<parallel>, #tpu.dimension_semantics<arbitrary>], iteration_bounds = array<i64: 1, 1>, scalar_prefetch = 0 : i64, scratch_operands = 3 : i64, tpu.core_type = #tpu.core_type<tc>, window_params = [{transform_indices = @transform_0, window_bounds = array<i64: 8, 32>}, {transform_indices = @transform_1, window_bounds = array<i64: 8, 32>}, {transform_indices = @transform_2, window_bounds = array<i64: 8, 1>}, {transform_indices = @transform_3, window_bounds = array<i64: 1, 8>}, {transform_indices = @transform_4, window_bounds = array<i64: 8, 1>}, {transform_indices = @transform_5, window_bounds = array<i64: 8, 1>}]} {
    %c0_i32 = arith.constant 0 : i32
    %0 = arith.cmpi eq, %arg1, %c0_i32 : i32
    %1 = arith.extui %0 : i1 to i32
    %c0_i32_0 = arith.constant 0 : i32
    %2 = arith.cmpi ne, %1, %c0_i32_0 : i32
    scf.if %2 {
      %cst_31 = arith.constant 0.000000e+00 : f32
      %45 = vector.broadcast %cst_31 : f32 to vector<8x1xf32>
      %c0_32 = arith.constant 0 : index
      %c0_33 = arith.constant 0 : index
      %46 = vector.load %arg8[%c0_32, %c0_33] : memref<8x1xf32, #tpu.memory_space<vmem>>, vector<8x1xf32>
      tpu.vector_store %arg8[%c0_32, %c0_33], %45 {strides = array<i32>} : memref<8x1xf32, #tpu.memory_space<vmem>>, vector<8x1xf32>,
      %cst_34 = arith.constant 0.000000e+00 : f32
      %47 = vector.broadcast %cst_34 : f32 to vector<8x1xf32>
      %c0_35 = arith.constant 0 : index
      %c0_36 = arith.constant 0 : index
      %48 = vector.load %arg9[%c0_35, %c0_36] : memref<8x1xf32, #tpu.memory_space<vmem>>, vector<8x1xf32>
      tpu.vector_store %arg9[%c0_35, %c0_36], %47 {strides = array<i32>} : memref<8x1xf32, #tpu.memory_space<vmem>>, vector<8x1xf32>,
      %cst_37 = arith.constant 0.000000e+00 : f32
      %49 = vector.broadcast %cst_37 : f32 to vector<8x1xf32>
      %c0_38 = arith.constant 0 : index
      %c0_39 = arith.constant 0 : index
      %50 = vector.load %arg10[%c0_38, %c0_39] : memref<8x1xf32, #tpu.memory_space<vmem>>, vector<8x1xf32>
      tpu.vector_store %arg10[%c0_38, %c0_39], %49 {strides = array<i32>} : memref<8x1xf32, #tpu.memory_space<vmem>>, vector<8x1xf32>,
    } else {
    }
    %c0 = arith.constant 0 : index
    %c0_1 = arith.constant 0 : index
    %3 = vector.load %arg2[%c0, %c0_1] : memref<8x32xbf16, #tpu.memory_space<vmem>>, vector<8x32xbf16>
    %c0_2 = arith.constant 0 : index
    %c0_3 = arith.constant 0 : index
    %4 = vector.load %arg3[%c0_2, %c0_3] : memref<8x32xbf16, #tpu.memory_space<vmem>>, vector<8x32xbf16>
    %cst = arith.constant dense<0.000000e+00> : vector<8x8xf32>
    %5 = tpu.matmul %3, %4, %cst {dimension_numbers = #tpu.dot_dimension_numbers<[1], [1], [0], [0], [0, 0, 1, 0], [], []>} : vector<8x32xbf16>, vector<8x32xbf16>, vector<8x8xf32> -> vector<8x8xf32>
    %cst_4 = arith.constant 1.000000e+01 : f32
    %6 = vector.broadcast %cst_4 : f32 to vector<8x8xf32>
    %7 = arith.subf %5, %6 : vector<8x8xf32>
    %8 = math.exp %7 : vector<8x8xf32>
    %c0_5 = arith.constant 0 : index
    %c0_6 = arith.constant 0 : index
    %9 = vector.load %arg5[%c0_5, %c0_6] : memref<1x8xi32, #tpu.memory_space<vmem>>, vector<1x8xi32>
    %c0_7 = arith.constant 0 : index
    %c0_8 = arith.constant 0 : index
    %10 = vector.load %arg4[%c0_7, %c0_8] : memref<8x1xi32, #tpu.memory_space<vmem>>, vector<8x1xi32>
    %11 = vector.broadcast %10 : vector<8x1xi32> to vector<8x8xi32>
    %12 = vector.broadcast %9 : vector<1x8xi32> to vector<8x8xi32>
    %13 = arith.cmpi eq, %11, %12 : vector<8x8xi32>
    %c0_9 = arith.constant 0 : index
    %c0_10 = arith.constant 0 : index
    %14 = vector.load %arg8[%c0_9, %c0_10] : memref<8x1xf32, #tpu.memory_space<vmem>>, vector<8x1xf32>
    %cst_11 = arith.constant dense<0.000000e+00> : vector<8xf32>
    %15 = vector.multi_reduction <add>, %8, %cst_11 [1] : vector<8x8xf32> to vector<8xf32>
    %16 = vector.shape_cast %15 : vector<8xf32> to vector<8x1xf32>
    %17 = arith.addf %14, %16 : vector<8x1xf32>
    %c0_12 = arith.constant 0 : index
    %c0_13 = arith.constant 0 : index
    %18 = vector.load %arg8[%c0_12, %c0_13] : memref<8x1xf32, #tpu.memory_space<vmem>>, vector<8x1xf32>
    tpu.vector_store %arg8[%c0_12, %c0_13], %17 {strides = array<i32>} : memref<8x1xf32, #tpu.memory_space<vmem>>, vector<8x1xf32>,
    %c0_14 = arith.constant 0 : index
    %c0_15 = arith.constant 0 : index
    %19 = vector.load %arg9[%c0_14, %c0_15] : memref<8x1xf32, #tpu.memory_space<vmem>>, vector<8x1xf32>
    %cst_16 = arith.constant 0.000000e+00 : f32
    %20 = vector.broadcast %cst_16 : f32 to vector<8x8xf32>
    %21 = arith.select %13, %5, %20 : vector<8x8xi1>, vector<8x8xf32>
    %cst_17 = arith.constant dense<0.000000e+00> : vector<8xf32>
    %22 = vector.multi_reduction <add>, %21, %cst_17 [1] : vector<8x8xf32> to vector<8xf32>
    %23 = vector.shape_cast %22 : vector<8xf32> to vector<8x1xf32>
    %24 = arith.addf %19, %23 : vector<8x1xf32>
    %c0_18 = arith.constant 0 : index
    %c0_19 = arith.constant 0 : index
    %25 = vector.load %arg9[%c0_18, %c0_19] : memref<8x1xf32, #tpu.memory_space<vmem>>, vector<8x1xf32>
    tpu.vector_store %arg9[%c0_18, %c0_19], %24 {strides = array<i32>} : memref<8x1xf32, #tpu.memory_space<vmem>>, vector<8x1xf32>,
    %c0_20 = arith.constant 0 : index
    %c0_21 = arith.constant 0 : index
    %26 = vector.load %arg10[%c0_20, %c0_21] : memref<8x1xf32, #tpu.memory_space<vmem>>, vector<8x1xf32>
    %27 = arith.extui %13 : vector<8x8xi1> to vector<8x8xi32>
    %28 = arith.sitofp %27 : vector<8x8xi32> to vector<8x8xf32>
    %cst_22 = arith.constant dense<0.000000e+00> : vector<8xf32>
    %29 = vector.multi_reduction <add>, %28, %cst_22 [1] : vector<8x8xf32> to vector<8xf32>
    %30 = vector.shape_cast %29 : vector<8xf32> to vector<8x1xf32>
    %31 = arith.addf %26, %30 : vector<8x1xf32>
    %c0_23 = arith.constant 0 : index
    %c0_24 = arith.constant 0 : index
    %32 = vector.load %arg10[%c0_23, %c0_24] : memref<8x1xf32, #tpu.memory_space<vmem>>, vector<8x1xf32>
    tpu.vector_store %arg10[%c0_23, %c0_24], %31 {strides = array<i32>} : memref<8x1xf32, #tpu.memory_space<vmem>>, vector<8x1xf32>,
    %c8_i32 = arith.constant 8 : i32
    %33 = arith.muli %arg0, %c8_i32 : i32
    %c8_i32_25 = arith.constant 8 : i32
    %34 = arith.muli %arg1, %c8_i32_25 : i32
    %c8_i32_26 = arith.constant 8 : i32
    %35 = arith.addi %34, %c8_i32_26 : i32
    %36 = arith.cmpi slt, %33, %35 : i32
    %c8_i32_27 = arith.constant 8 : i32
    %37 = arith.addi %33, %c8_i32_27 : i32
    %38 = arith.cmpi slt, %34, %37 : i32
    %39 = arith.andi %36, %38 : i1
    %40 = arith.extui %39 : i1 to i32
    %c0_i32_28 = arith.constant 0 : i32
    %41 = arith.cmpi ne, %40, %c0_i32_28 : i32
    scf.if %41 {
      %45 = tpu.iota {dimensions = array<i32: 0>} : vector<8x8xi32>
      %46 = vector.broadcast %33 : i32 to vector<8x8xi32>
      %47 = arith.addi %46, %45 : vector<8x8xi32>
      %48 = tpu.iota {dimensions = array<i32: 1>} : vector<8x8xi32>
      %49 = vector.broadcast %34 : i32 to vector<8x8xi32>
      %50 = arith.addi %49, %48 : vector<8x8xi32>
      %51 = arith.cmpi eq, %47, %50 : vector<8x8xi32>
      %c0_31 = arith.constant 0 : index
      %c0_32 = arith.constant 0 : index
      %52 = vector.load %arg8[%c0_31, %c0_32] : memref<8x1xf32, #tpu.memory_space<vmem>>, vector<8x1xf32>
      %cst_33 = arith.constant 0.000000e+00 : f32
      %53 = vector.broadcast %cst_33 : f32 to vector<8x8xf32>
      %54 = arith.select %51, %8, %53 : vector<8x8xi1>, vector<8x8xf32>
      %cst_34 = arith.constant dense<0.000000e+00> : vector<8xf32>
      %55 = vector.multi_reduction <add>, %54, %cst_34 [1] : vector<8x8xf32> to vector<8xf32>
      %56 = vector.shape_cast %55 : vector<8xf32> to vector<8x1xf32>
      %57 = arith.subf %52, %56 : vector<8x1xf32>
      %c0_35 = arith.constant 0 : index
      %c0_36 = arith.constant 0 : index
      %58 = vector.load %arg8[%c0_35, %c0_36] : memref<8x1xf32, #tpu.memory_space<vmem>>, vector<8x1xf32>
      tpu.vector_store %arg8[%c0_35, %c0_36], %57 {strides = array<i32>} : memref<8x1xf32, #tpu.memory_space<vmem>>, vector<8x1xf32>,
      %c0_37 = arith.constant 0 : index
      %c0_38 = arith.constant 0 : index
      %59 = vector.load %arg9[%c0_37, %c0_38] : memref<8x1xf32, #tpu.memory_space<vmem>>, vector<8x1xf32>
      %cst_39 = arith.constant 0.000000e+00 : f32
      %60 = vector.broadcast %cst_39 : f32 to vector<8x8xf32>
      %61 = arith.select %51, %5, %60 : vector<8x8xi1>, vector<8x8xf32>
      %cst_40 = arith.constant dense<0.000000e+00> : vector<8xf32>
      %62 = vector.multi_reduction <add>, %61, %cst_40 [1] : vector<8x8xf32> to vector<8xf32>
      %63 = vector.shape_cast %62 : vector<8xf32> to vector<8x1xf32>
      %64 = arith.subf %59, %63 : vector<8x1xf32>
      %c0_41 = arith.constant 0 : index
      %c0_42 = arith.constant 0 : index
      %65 = vector.load %arg9[%c0_41, %c0_42] : memref<8x1xf32, #tpu.memory_space<vmem>>, vector<8x1xf32>
      tpu.vector_store %arg9[%c0_41, %c0_42], %64 {strides = array<i32>} : memref<8x1xf32, #tpu.memory_space<vmem>>, vector<8x1xf32>,
      %c0_43 = arith.constant 0 : index
      %c0_44 = arith.constant 0 : index
      %66 = vector.load %arg10[%c0_43, %c0_44] : memref<8x1xf32, #tpu.memory_space<vmem>>, vector<8x1xf32>
      %67 = arith.extui %51 : vector<8x8xi1> to vector<8x8xi32>
      %68 = arith.sitofp %67 : vector<8x8xi32> to vector<8x8xf32>
      %cst_45 = arith.constant dense<0.000000e+00> : vector<8xf32>
      %69 = vector.multi_reduction <add>, %68, %cst_45 [1] : vector<8x8xf32> to vector<8xf32>
      %70 = vector.shape_cast %69 : vector<8xf32> to vector<8x1xf32>
      %71 = arith.subf %66, %70 : vector<8x1xf32>
      %c0_46 = arith.constant 0 : index
      %c0_47 = arith.constant 0 : index
      %72 = vector.load %arg10[%c0_46, %c0_47] : memref<8x1xf32, #tpu.memory_space<vmem>>, vector<8x1xf32>
      tpu.vector_store %arg10[%c0_46, %c0_47], %71 {strides = array<i32>} : memref<8x1xf32, #tpu.memory_space<vmem>>, vector<8x1xf32>,
    } else {
    }
    %c0_i32_29 = arith.constant 0 : i32
    %42 = arith.cmpi eq, %arg1, %c0_i32_29 : i32
    %43 = arith.extui %42 : i1 to i32
    %c0_i32_30 = arith.constant 0 : i32
    %44 = arith.cmpi ne, %43, %c0_i32_30 : i32
    scf.if %44 {
      %c0_31 = arith.constant 0 : index
      %c0_32 = arith.constant 0 : index
      %45 = vector.load %arg10[%c0_31, %c0_32] : memref<8x1xf32, #tpu.memory_space<vmem>>, vector<8x1xf32>
      %cst_33 = arith.constant 0.000000e+00 : f32
      %46 = vector.broadcast %cst_33 : f32 to vector<8x1xf32>
      %47 = arith.cmpf ogt, %45, %46 : vector<8x1xf32>
      %cst_34 = arith.constant 1.000000e+00 : f32
      %48 = vector.broadcast %cst_34 : f32 to vector<8x1xf32>
      %49 = arith.select %47, %45, %48 : vector<8x1xi1>, vector<8x1xf32>
      %c0_35 = arith.constant 0 : index
      %c0_36 = arith.constant 0 : index
      %50 = vector.load %arg8[%c0_35, %c0_36] : memref<8x1xf32, #tpu.memory_space<vmem>>, vector<8x1xf32>
      %51 = math.log %50 : vector<8x1xf32>
      %cst_37 = arith.constant 1.000000e+01 : f32
      %52 = vector.broadcast %cst_37 : f32 to vector<8x1xf32>
      %53 = arith.addf %51, %52 : vector<8x1xf32>
      %c0_38 = arith.constant 0 : index
      %c0_39 = arith.constant 0 : index
      %54 = vector.load %arg9[%c0_38, %c0_39] : memref<8x1xf32, #tpu.memory_space<vmem>>, vector<8x1xf32>
      %55 = arith.divf %54, %49 : vector<8x1xf32>
      %56 = arith.subf %53, %55 : vector<8x1xf32>
      %cst_40 = arith.constant 0.000000e+00 : f32
      %57 = vector.broadcast %cst_40 : f32 to vector<8x1xf32>
      %58 = arith.select %47, %56, %57 : vector<8x1xi1>, vector<8x1xf32>
      %c0_41 = arith.constant 0 : index
      %c0_42 = arith.constant 0 : index
      %59 = vector.load %arg6[%c0_41, %c0_42] : memref<8x1xf32, #tpu.memory_space<vmem>>, vector<8x1xf32>
      tpu.vector_store %arg6[%c0_41, %c0_42], %58 {strides = array<i32>} : memref<8x1xf32, #tpu.memory_space<vmem>>, vector<8x1xf32>,
      %60 = arith.extui %47 : vector<8x1xi1> to vector<8x1xi32>
      %61 = arith.sitofp %60 : vector<8x1xi32> to vector<8x1xf32>
      %c0_43 = arith.constant 0 : index
      %c0_44 = arith.constant 0 : index
      %62 = vector.load %arg7[%c0_43, %c0_44] : memref<8x1xf32, #tpu.memory_space<vmem>>, vector<8x1xf32>
      tpu.vector_store %arg7[%c0_43, %c0_44], %61 {strides = array<i32>} : memref<8x1xf32, #tpu.memory_space<vmem>>, vector<8x1xf32>,
    } else {
    }
    return
  }
  func.func @transform_0(%arg0: i32, %arg1: i32) -> (i32, i32) {
    %c0_i32 = arith.constant 0 : i32
    %c0_i32_0 = arith.constant 0 : i32
    return %arg0, %c0_i32 : i32, i32
  }
  func.func @transform_1(%arg0: i32, %arg1: i32) -> (i32, i32) {
    %c0_i32 = arith.constant 0 : i32
    %c0_i32_0 = arith.constant 0 : i32
    return %arg1, %c0_i32 : i32, i32
  }
  func.func @transform_2(%arg0: i32, %arg1: i32) -> (i32, i32) {
    %c0_i32 = arith.constant 0 : i32
    %c0_i32_0 = arith.constant 0 : i32
    return %arg0, %c0_i32 : i32, i32
  }
  func.func @transform_3(%arg0: i32, %arg1: i32) -> (i32, i32) {
    %c0_i32 = arith.constant 0 : i32
    %c0_i32_0 = arith.constant 0 : i32
    return %c0_i32, %arg1 : i32, i32
  }
  func.func @transform_4(%arg0: i32, %arg1: i32) -> (i32, i32) {
    %c0_i32 = arith.constant 0 : i32
    %c0_i32_0 = arith.constant 0 : i32
    return %arg0, %c0_i32 : i32, i32
  }
  func.func @transform_5(%arg0: i32, %arg1: i32) -> (i32, i32) {
    %c0_i32 = arith.constant 0 : i32
    %c0_i32_0 = arith.constant 0 : i32
    return %arg0, %c0_i32 : i32, i32
  }
}

</mosaic_0001>

<llo_original>
// kernel: tpu_custom_call.1
$region0: #{tpu_custom_call.1}
  #allocation0 [shape = 'u32[]', space=smem, size = 0x4, offset = 0x4, fixed_abs, tag = 'smem constant byte address 0x4 - core index']
  #allocation1 [shape = 'u32[144,128]{1,0:T(1,128)}', space=vmem, size = 0x12000, scoped, tag = 'internal scratch']
  #allocation2 [shape = 'f32[8,1]{1,0:T(8,128)}', space=vmem, size = 0x1000, scoped, tag = 'scratch operand']
  #allocation3 [shape = 'f32[8,1]{1,0:T(8,128)}', space=vmem, size = 0x1000, scoped, tag = 'scratch operand']
  #allocation4 [shape = 'f32[8,1]{1,0:T(8,128)}', space=vmem, size = 0x1000, scoped, tag = 'scratch operand']
  %s0 = inlined_call_operand.vmem [shape: bf16[8,32], index: 0, kind: input, shape index: {}]
  %s1 = inlined_call_operand.vmem [shape: bf16[8,32], index: 1, kind: input, shape index: {}]
  %s2 = inlined_call_operand.vmem [shape: s32[8,1], index: 2, kind: input, shape index: {}]
  %s3 = inlined_call_operand.vmem [shape: s32[1,8], index: 3, kind: input, shape index: {}]
  %s4 = inlined_call_operand.vmem [shape: f32[8,1], index: 4, kind: output, shape index: {0}]
  %s5 = inlined_call_operand.vmem [shape: f32[8,1], index: 5, kind: output, shape index: {1}]
  %6 = xla_tuple %s4, %s5
  %s7 = sld [smem:[#allocation0]]
  $region46: #{tpu_custom_call.1} parent=0
    _
  %s9 = ssub.s32 1, %s7
  %s10 = scalar_select 0, %s9, %s7
  // Predicated region
  $region2: #{tpu_custom_call.1} parent=0 // pred_check
    _
  $region3: #{tpu_custom_call.1} parent=0 // pred_check_branch
    %12 = sbr.rel (0) target = $region5
  $region4: #{tpu_custom_call.1} parent=0 // pred_region
    _
  $region5: #{tpu_custom_call.1} parent=0 // pred_fallthru
    _
  // Predicated region
  $region6: #{tpu_custom_call.1} parent=0 // pred_check
    _
  $region7: #{tpu_custom_call.1} parent=0 // pred_check_branch
    %14 = sbr.rel (0) target = $region9
  $region8: #{tpu_custom_call.1} parent=0 // pred_region
    _
  $region9: #{tpu_custom_call.1} parent=0 // pred_fallthru
    _
  // Predicated region
  $region10: #{tpu_custom_call.1} parent=0 // pred_check
    _
  $region11: #{tpu_custom_call.1} parent=0 // pred_check_branch
    %16 = sbr.rel (0) target = $region13
  $region12: #{tpu_custom_call.1} parent=0 // pred_region
    _
  $region13: #{tpu_custom_call.1} parent=0 // pred_fallthru
    _
  // Predicated region
  $region14: #{tpu_custom_call.1} parent=0 // pred_check
    _
  $region15: #{tpu_custom_call.1} parent=0 // pred_check_branch
    %18 = sbr.rel (0) target = $region17
  $region16: #{tpu_custom_call.1} parent=0 // pred_region
    _
  $region17: #{tpu_custom_call.1} parent=0 // pred_fallthru
    _
  %p20 = scmp.eq.s32.totalorder 0, 0
  // Predicated region
  $region18: #{tpu_custom_call.1} parent=0 // pred_check
    %p21 = pneg %p20
  $region19: #{tpu_custom_call.1} parent=0 // pred_check_branch
    %23 = sbr.rel (%p21) target = $region21
  $region20: #{tpu_custom_call.1} parent=0 // pred_region
    %vm24 = vcmask 7168
    %25 = vst.msk [vmem:[#allocation2] sm:$0xff] %vm24, 0.0
    %26 = vst.msk [vmem:[#allocation3] sm:$0xff] %vm24, 0.0
    %27 = vst.msk [vmem:[#allocation4] sm:$0xff] %vm24, 0.0
  $region21: #{tpu_custom_call.1} parent=0 // pred_fallthru
    _
  %v28 = vld [vmem:[%s0] sm:$0xf]
  %v29 = vld [vmem:[%s1] sm:$0xf]
  %vm30 = vcmask 261120
  %v32 = vsel %vm30, %v28, 0
  %v35 = vsel %vm30, %v29, 0
  %37 = vmatprep.subr.bf16.mxu0 0
  %38 = vmatpush1.bf16.xpose.msra.mxu0 %v35
  %39 = vmatprep.subr.bf16.mxu0 0
  %40 = vmatpush1.bf16.xpose.msra.mxu0 0
  %41 = vmatprep.subr.bf16.mxu0 0
  %42 = vmatpush1.bf16.xpose.msra.mxu0 0
  %43 = vmatprep.subr.bf16.mxu0 0
  %44 = vmatpush1.bf16.xpose.msra.mxu0 0
  %45 = vmatprep.subr.bf16.mxu0 0
  %46 = vmatpush1.bf16.xpose.msra.mxu0 0
  %47 = vmatprep.subr.bf16.mxu0 0
  %48 = vmatpush1.bf16.xpose.msra.mxu0 0
  %49 = vmatprep.subr.bf16.mxu0 0
  %50 = vmatpush1.bf16.xpose.msra.mxu0 0
  %51 = vmatprep.subr.bf16.mxu0 0
  %52 = vmatpush1.bf16.xpose.msra.mxu0 0
  %53 = vmatprep.subr.bf16.mxu0 0
  %54 = vmatpush1.bf16.xpose.msra.mxu0 0
  %55 = vmatprep.subr.bf16.mxu0 0
  %56 = vmatpush1.bf16.xpose.msra.mxu0 0
  %57 = vmatprep.subr.bf16.mxu0 0
  %58 = vmatpush1.bf16.xpose.msra.mxu0 0
  %59 = vmatprep.subr.bf16.mxu0 0
  %60 = vmatpush1.bf16.xpose.msra.mxu0 0
  %61 = vmatprep.subr.bf16.mxu0 0
  %62 = vmatpush1.bf16.xpose.msra.mxu0 0
  %63 = vmatprep.subr.bf16.mxu0 0
  %64 = vmatpush1.bf16.xpose.msra.mxu0 0
  %65 = vmatprep.subr.bf16.mxu0 0
  %66 = vmatpush1.bf16.xpose.msra.mxu0 0
  %67 = vmatprep.subr.bf16.mxu0 0
  %68 = vmatpush1.bf16.xpose.msra.mxu0 0
  %69 = vmatprep.mubr.bf16.mxu0 0
  %70 = vmatmul.mubr.bf16.gmra.mrb[0].mxu0 %v32
  %v71 = vpop.f32.mrb[0].mxu0
  %v72 = vadd.f32 0.0, %v71
  %v73 = vpop.f32.mrb[0].mxu0
  %v74 = vpop.f32.mrb[0].mxu0
  %v75 = vpop.f32.mrb[0].mxu0
  %76 = vdwg.mxu0
  %v77 = vsub.f32 %v72, 10.0
  %v78 = vmul.f32 %v77, 1.442695
  %v79 = vpow.pop %v78
  %v80 = vld [vmem:[%s3] sm:$0x1]
  %v81 = vld [vmem:[%s2] sm:$0xff]
  %82 = vset.pattern.permute.xlu0 0
  %83 = vperm.xlu0 %82, %v81
  %v84 = vpop.permute.xlu0 %83
  %v85 = vlaneseq
  %v86 = vshrl.u32 %v85, 7
  %v87 = vsub.s32 0, %v86
  %v88 = vrot.slane %v80, %v87
  %vm89 = vcmp.eq.s32.totalorder %v84, %v88
  %v90 = vld [vmem:[#allocation2] sm:$0xff]
  %vm91 = vcmask 64512
  %v92 = vsel %vm91, %v79, 0.0
  %93 = vadd.xlane.f32.xlu0 %v92
  %v94 = vpop.xlane.xlu0 %93
  %v95 = vadd.f32 %v90, %v94
  %vm96 = vcmask 7168
  %97 = vst.msk [vmem:[#allocation2] sm:$0xff] %vm96, %v95
  %v98 = vld [vmem:[#allocation3] sm:$0xff]
  %v99 = vsel %vm89, %v72, 0.0
  %v100 = vsel %vm91, %v99, 0.0
  %101 = vadd.xlane.f32.xlu0 %v100
  %v102 = vpop.xlane.xlu0 %101
  %v103 = vadd.f32 %v98, %v102
  %104 = vst.msk [vmem:[#allocation3] sm:$0xff] %vm96, %v103
  %v105 = vld [vmem:[#allocation4] sm:$0xff]
  %v106 = vsel %vm89, 1, 0
  %v107 = vcvt.s32.f32 %v106
  %v108 = vsel %vm91, %v107, 0.0
  %109 = vadd.xlane.f32.xlu0 %v108
  %v110 = vpop.xlane.xlu0 %109
  %v111 = vadd.f32 %v105, %v110
  %112 = vst.msk [vmem:[#allocation4] sm:$0xff] %vm96, %v111
  %s113 = smul.u32 0, 8
  %s114 = smul.u32 0, 8
  %s115 = sadd.s32 %s114, 8
  %p116 = scmp.lt.s32.totalorder %s113, %s115
  %s117 = sadd.s32 %s113, 8
  %p118 = scmp.lt.s32.totalorder %s114, %s117
  %p119 = pnand %p116, %p118
  %p120 = pneg %p119
  // Predicated region
  $region22: #{tpu_custom_call.1} parent=0 // pred_check
    _
  $region23: #{tpu_custom_call.1} parent=0 // pred_check_branch
    %122 = sbr.rel (%p119) target = $region25
  $region24: #{tpu_custom_call.1} parent=0 // pred_region
    %v123 = vlaneseq
    %v124 = vshrl.u32 %v123, 7
    %v125 = vstv %s113
    %v126 = vadd.s32 %v125, %v124
    %v127 = vlaneseq
    %v128 = vand.u32 %v127, 127
    %v129 = vstv %s114
    %v130 = vadd.s32 %v129, %v128
    %vm131 = vcmp.eq.s32.totalorder %v126, %v130
    %v132 = vld [vmem:[#allocation2] sm:$0xff]
    %v133 = vsel %vm131, %v79, 0.0
    %v134 = vsel %vm91, %v133, 0.0
    %135 = vadd.xlane.f32.xlu0 %v134
    %v136 = vpop.xlane.xlu0 %135
    %v137 = vsub.f32 %v132, %v136
    %138 = vst.msk [vmem:[#allocation2] sm:$0xff] %vm96, %v137
    %v139 = vld [vmem:[#allocation3] sm:$0xff]
    %v140 = vsel %vm131, %v72, 0.0
    %v141 = vsel %vm91, %v140, 0.0
    %142 = vadd.xlane.f32.xlu0 %v141
    %v143 = vpop.xlane.xlu0 %142
    %v144 = vsub.f32 %v139, %v143
    %145 = vst.msk [vmem:[#allocation3] sm:$0xff] %vm96, %v144
    %v146 = vld [vmem:[#allocation4] sm:$0xff]
    %v147 = vsel %vm131, 1, 0
    %v148 = vcvt.s32.f32 %v147
    %v149 = vsel %vm91, %v148, 0.0
    %150 = vadd.xlane.f32.xlu0 %v149
    %v151 = vpop.xlane.xlu0 %150
    %v152 = vsub.f32 %v146, %v151
    %153 = vst.msk [vmem:[#allocation4] sm:$0xff] %vm96, %v152
  $region25: #{tpu_custom_call.1} parent=0 // pred_fallthru
    _
  // Predicated region
  $region26: #{tpu_custom_call.1} parent=0 // pred_check
    %p154 = pneg %p20
  $region27: #{tpu_custom_call.1} parent=0 // pred_check_branch
    %156 = sbr.rel (%p154) target = $region29
  $region28: #{tpu_custom_call.1} parent=0 // pred_region
    %v157 = vld [vmem:[#allocation4] sm:$0xff]
    %vm158 = vcmp.gt.f32.partialorder %v157, 0.0
    %v159 = vsel %vm158, %v157, 1.0
    %v160 = vld [vmem:[#allocation2] sm:$0xff]
    %v161 = vlog2.pop %v160
    %v162 = vmul.f32 %v161, 0.6931472
    %v163 = vadd.f32 %v162, 10.0
    %v164 = vld [vmem:[#allocation3] sm:$0xff]
    %v165 = vrcp.pop %v159
    %v166 = vmul.f32 %v164, %v165
    %v167 = vsub.f32 %v163, %v166
    %v168 = vsel %vm158, %v167, 0.0
    %169 = vst.msk [vmem:[%s4] sm:$0xff] %vm96, %v168
    %v170 = vsel %vm158, 1, 0
    %v171 = vcvt.s32.f32 %v170
    %172 = vst.msk [vmem:[%s5] sm:$0xff] %vm96, %v171
  $region29: #{tpu_custom_call.1} parent=0 // pred_fallthru
    _
  // Predicated region
  $region30: #{tpu_custom_call.1} parent=0 // pred_check
    _
  $region31: #{tpu_custom_call.1} parent=0 // pred_check_branch
    %174 = sbr.rel (0) target = $region33
  $region32: #{tpu_custom_call.1} parent=0 // pred_region
    _
  $region33: #{tpu_custom_call.1} parent=0 // pred_fallthru
    _
  // Predicated region
  $region34: #{tpu_custom_call.1} parent=0 // pred_check
    _
  $region35: #{tpu_custom_call.1} parent=0 // pred_check_branch
    %176 = sbr.rel (0) target = $region37
  $region36: #{tpu_custom_call.1} parent=0 // pred_region
    _
  $region37: #{tpu_custom_call.1} parent=0 // pred_fallthru
    _
  // Predicated region
  $region38: #{tpu_custom_call.1} parent=0 // pred_check
    _
  $region39: #{tpu_custom_call.1} parent=0 // pred_check_branch
    %178 = sbr.rel (0) target = $region41
  $region40: #{tpu_custom_call.1} parent=0 // pred_region
    _
  $region41: #{tpu_custom_call.1} parent=0 // pred_fallthru
    _
  // Predicated region
  $region42: #{tpu_custom_call.1} parent=0 // pred_check
    _
  $region43: #{tpu_custom_call.1} parent=0 // pred_check_branch
    %180 = sbr.rel (0) target = $region45
  $region44: #{tpu_custom_call.1} parent=0 // pred_region
    _
  $region45: #{tpu_custom_call.1} parent=0 // pred_fallthru
    _

</llo_original>
